<compile_context>
chip_gen: v7x
topology: tpu7x:2x2x1
jax: 0.10.0
libtpu: 0.0.40
codegen_flags: <defaults>
</compile_context>

<pallas_src>
import numpy as np
import jax
import jax.numpy as jnp
from jax.experimental import pallas as pl
from jax.experimental.pallas import tpu as pltpu

ALEX_CHNS = (64, 192, 384, 256, 256)   # self.chns for net='alex'
EPS = 1e-10                            # lpips.normalize_tensor eps


# ----------------------------- VMEM / tiling heuristics -----------------------

def _vmem_capacity_bytes():
    try:
        info = pltpu.get_tpu_info()
        cap = getattr(info, "vmem_capacity_bytes", None)
        if cap:
            return int(cap)
    except Exception:
        pass
    return 64 * 1024 * 1024            # conservative (v7x-sized) fallback


def _estimate_vmem_bytes(tile, C):
    """Rough upper bound on live VMEM for one grid step of the fused group kernel."""
    x_blk = 2 * (2 * 8 * tile * 4)     # (2, 3->8 sublanes, tile) f32, double-buffered
    wsp_blk = 2 * (8 * tile * 4)       # (1->8, tile) f32, double-buffered
    par_blk = 2 * (C * 128 * 4)        # (C, 8->128 lanes) f32, double-buffered
    temps = 7 * C * tile * 4           # f0, f1, normalized feats, diff + elementwise temps
    return x_blk + wsp_blk + par_blk + temps + (2 << 20)


def _ceil_to(x, m):
    return ((x + m - 1) // m) * m


def _choose_tile(P, C, budget_bytes):
    tile = 128
    for cand in (2048, 1792, 1536, 1280, 1024, 896, 768, 640, 512, 384, 256, 128):
        if _estimate_vmem_bytes(cand, C) <= budget_bytes:
            tile = cand
            break
    if P <= tile:
        return P, P                    # single full-extent block (grid of 1 tile)
    return tile, _ceil_to(P, tile)


# ----------------------------- fused per-group kernel --------------------------

def _make_group_kernel(seg_bounds, n_tiles):
    """Fused LPIPS layer-group kernel (one or several layers sharing a resolution).

    Block shapes (per grid step, after squeezing the batch dim):
      x_ref   : (2, 3, tile)  pooled (x0, x1) raw-input tile; channels on sublanes,
                              pixels on lanes (ScalingLayer folded into the params)
      par_ref : (C, 8)        packed [w0 w1 w2 bias wlin 0 0 0] per output channel
      wsp_ref : (1, tile)     bilinear-upsample + spatial-mean weights for this tile
      o_ref   : (1, n_seg)    per-layer LPIPS values for this batch element
      acc_ref : (1, n_seg)    VMEM scratch accumulator (copied to o_ref on last tile)
    """
    def kernel(x_ref, par_ref, wsp_ref, o_ref, acc_ref):
        t = pl.program_id(1)

        @pl.when(t == 0)
        def _init():
            acc_ref[...] = jnp.zeros_like(acc_ref)

        par = par_ref[...]                                    # (C, 8), resident
        w0, w1, w2 = par[:, 0:1], par[:, 1:2], par[:, 2:3]    # (C, 1) each
        bias, wlin = par[:, 3:4], par[:, 4:5]

        def normalized_feats(xn):                             # xn: (3, tile)
            # Synthetic trunk stage: ReLU of a K=3 projection computed as three VPU
            # broadcast-FMAs (a K=3 matmul would use <3% of the MXU).
            # TODO(synk): the real trunk is pn.alexnet (external pretrained net, not part
            # of this module); substituted with a deterministic projection + ReLU so the
            # rest of the LPIPS math is exercised exactly.
            f = jnp.maximum(
                w0 * xn[0:1, :] + w1 * xn[1:2, :] + w2 * xn[2:3, :] + bias, 0.0)  # (C, tile)
            # normalize_tensor: the channel sum runs over the sublane axis (VPU vreg adds
            # + one sublane reduce).  rsqrt replaces sqrt + reciprocal; eps moves inside
            # the sqrt, numerically negligible at eps=1e-10.
            inv = jax.lax.rsqrt(jnp.sum(f * f, axis=0, keepdims=True) + EPS * EPS)
            return f * inv

        x = x_ref[...]                                        # (2, 3, tile)
        d = (normalized_feats(x[0]) - normalized_feats(x[1])) ** 2      # (C, tile)

        wsp = wsp_ref[...]                                    # (1, tile)
        for j, (c0, c1) in enumerate(seg_bounds):
            # NetLinLayer 1x1 conv (no bias; dropout is identity in eval mode) for layer j
            # of this group, then upsample + spatial_average as a weighted pixel sum.
            lin = jnp.sum(d[c0:c1, :] * wlin[c0:c1, :], axis=0, keepdims=True)   # (1, tile)
            acc_ref[:, j:j + 1] += jnp.sum(lin * wsp, axis=1, keepdims=True)     # (1, 1)

        @pl.when(t == n_tiles - 1)
        def _finalize():
            o_ref[...] = acc_ref[...]

    return kernel


# ----------------------------- pallas_call wrapper -----------------------------

def fused_lpips_group(xs, par, wsp, seg_bounds):
    """xs: (B, 2, 3, P) pooled inputs; par: (C, 8); wsp: (1, P) -> (B, 1, n_seg)."""
    B = xs.shape[0]
    P = xs.shape[-1]
    C = par.shape[0]
    n_seg = len(seg_bounds)

    cap = _vmem_capacity_bytes()
    budget = max(16 << 20, min(cap // 3, 40 << 20))
    tile, P_pad = _choose_tile(P, C, budget)
    if P_pad != P:
        # zero-padded pixels: f0 == f1 there (d = 0) and wsp = 0, so they contribute 0.
        xs = jnp.pad(xs, ((0, 0), (0, 0), (0, 0), (0, P_pad - P)))
        wsp = jnp.pad(wsp, ((0, 0), (0, P_pad - P)))
    n_tiles = P_pad // tile

    est = _estimate_vmem_bytes(tile, C)
    vmem_limit = int(min(max(est + (4 << 20), 16 << 20), cap // 2))

    return pl.pallas_call(
        _make_group_kernel(seg_bounds, n_tiles),
        out_shape=jax.ShapeDtypeStruct((B, 1, n_seg), jnp.float32),
        grid=(B, n_tiles),
        in_specs=[
            pl.BlockSpec((None, 2, 3, tile), lambda b, t: (b, 0, 0, t)),  # pooled x0/x1
            pl.BlockSpec((C, 8), lambda b, t: (0, 0)),                    # packed params
            pl.BlockSpec((1, tile), lambda b, t: (0, t)),                 # spatial weights
        ],
        out_specs=pl.BlockSpec((None, 1, n_seg), lambda b, t: (b, 0, 0)),
        scratch_shapes=[pltpu.VMEM((1, n_seg), jnp.float32)],
        compiler_params=pltpu.CompilerParams(
            dimension_semantics=("parallel", "arbitrary"),  # batch || (v7x 2 TCs), pixels = reduction
            vmem_limit_bytes=vmem_limit,
        ),
    )(xs, par, wsp)


# ----------------------------- glue / parameters ------------------------------

def _upsample_mean_weights(n_in, n_out):
    # weight[i] = coefficient of input index i in the mean of the
    # nn.Upsample(mode='bilinear', align_corners=False) output of length n_out.
    # (2-D bilinear is separable, so the 2-D weights are an outer product.)
    o = np.arange(n_out, dtype=np.float64)
    src = np.maximum((o + 0.5) * (n_in / n_out) - 0.5, 0.0)
    i0 = np.minimum(np.floor(src).astype(np.int64), n_in - 1)
    i1 = np.minimum(i0 + 1, n_in - 1)
    lam1 = src - i0
    lam0 = 1.0 - lam1
    w = np.zeros(n_in, dtype=np.float64)
    np.add.at(w, i0, lam0)
    np.add.at(w, i1, lam1)
    return w / n_out


def make_params(H, W, key):
    # Feature-map spatial sizes of the synthetic trunk (downsampling like a CNN trunk).
    feat_hw = [(H, W), (H // 2, W // 2), (H // 4, W // 4), (H // 4, W // 4), (H // 4, W // 4)]
    shift = jnp.asarray([-0.030, -0.088, -0.188], jnp.float32)   # ScalingLayer buffers
    scale = jnp.asarray([0.458, 0.448, 0.450], jnp.float32)

    w_fold, b_fold, lin_w = [], [], []
    for Cl in ALEX_CHNS:
        key, sub = jax.random.split(key)
        w = jax.random.normal(sub, (3, Cl), jnp.float32) * 0.1
        # fold ScalingLayer: ((x-shift)/scale) @ W == x @ (W/scale[:,None]) - (shift/scale) @ W
        w_fold.append((w / scale[:, None]).astype(jnp.float32))       # (3, Cl)
        b_fold.append((-(shift / scale) @ w).astype(jnp.float32))     # (Cl,)
        # NetLinLayer.init_weights fills the 1x1 conv weight with 0.1 (no checkpoint load).
        lin_w.append(jnp.full((Cl,), 0.1, jnp.float32))

    # Group layers that share a feature-map resolution (kk = 2..4) into one kernel call.
    groups, kk, L = [], 0, len(ALEX_CHNS)
    while kk < L:
        idxs = [kk]
        while kk + len(idxs) < L and feat_hw[kk + len(idxs)] == feat_hw[kk]:
            idxs.append(kk + len(idxs))
        hk, wk = feat_hw[kk]
        wT = jnp.concatenate([w_fold[i].T for i in idxs], axis=0)           # (C_tot, 3)
        bb = jnp.concatenate([b_fold[i] for i in idxs], axis=0)[:, None]    # (C_tot, 1)
        wl = jnp.concatenate([lin_w[i] for i in idxs], axis=0)[:, None]     # (C_tot, 1)
        C_tot = wT.shape[0]
        par = jnp.concatenate(
            [wT, bb, wl, jnp.zeros((C_tot, 3), jnp.float32)], axis=1)       # (C_tot, 8)
        seg_bounds, off = [], 0
        for i in idxs:
            seg_bounds.append((off, off + ALEX_CHNS[i]))
            off += ALEX_CHNS[i]
        wh = _upsample_mean_weights(hk, H)
        ww = _upsample_mean_weights(wk, W)
        wsp = jnp.asarray(np.outer(wh, ww).reshape(1, hk * wk), jnp.float32)
        groups.append(dict(hw=(hk, wk), layer_idxs=tuple(idxs),
                           seg_bounds=tuple(seg_bounds), par=par, wsp=wsp))
        kk += len(idxs)
    return dict(feat_hw=feat_hw, groups=groups)


def lpips_forward(in0_nchw, in1_nchw, params, normalize=False, retPerLayer=True):
    B, Cin, H, W = in0_nchw.shape
    if normalize:
        in0_nchw = 2.0 * in0_nchw - 1.0
        in1_nchw = 2.0 * in1_nchw - 1.0

    res = [None] * len(ALEX_CHNS)
    # TODO(synk): reference code's non-spatial branch loops `range(2*self.L)` and calls
    # self.mask_img (cv2.imread of 'masks/mask.png'); that is out-of-range / file I/O,
    # so we implement the well-defined L-layer path with the mask treated as all-ones.
    for g in params["groups"]:
        hk, wk = g["hw"]
        fh, fw = H // hk, W // wk

        def pool(x):
            # avg-pool spatial downsample of the synthetic trunk (glue); NCHW already has
            # channels on the 3rd-from-last axis, and the pool commutes exactly with the
            # per-channel affine ScalingLayer folded into the packed params.
            # TODO(synk): could be folded into the kernel via index_map for large H, W.
            return x.reshape(B, Cin, hk, fh, wk, fw).mean(axis=(3, 5)).reshape(B, Cin, hk * wk)

        xs = jnp.stack([pool(in0_nchw), pool(in1_nchw)], axis=1)            # (B, 2, 3, P)
        out = fused_lpips_group(xs, g["par"], g["wsp"], g["seg_bounds"])    # (B, 1, n_seg)
        for j, kk in enumerate(g["layer_idxs"]):
            # matches spatial_average(upsample(lin(diff)), keepdim=True)
            res[kk] = out[:, :, j].reshape(B, 1, 1, 1)

    val = res[0]
    for l in range(1, len(ALEX_CHNS)):
        val = val + res[l]
    return (val, res) if retPerLayer else val


# ----------------------------- pure-jnp reference ------------------------------

def lpips_reference(in0_nchw, in1_nchw, params, normalize=False):
    """Pure-jnp reference for the exact math the kernels implement (validation only)."""
    B, Cin, H, W = in0_nchw.shape
    if normalize:
        in0_nchw = 2.0 * in0_nchw - 1.0
        in1_nchw = 2.0 * in1_nchw - 1.0
    res = [None] * len(ALEX_CHNS)
    for g in params["groups"]:
        hk, wk = g["hw"]
        fh, fw = H // hk, W // wk

        def pool(x):
            return x.reshape(B, Cin, hk, fh, wk, fw).mean(axis=(3, 5)).reshape(B, Cin, hk * wk)

        par = g["par"]
        wT, bb, wl = par[:, 0:3], par[:, 3], par[:, 4]

        def feats(x):  # x: (B, 3, P)
            f = jnp.maximum(jnp.einsum('ck,bkp->bcp', wT, x) + bb[None, :, None], 0.0)
            n = jnp.sqrt(jnp.sum(f * f, axis=1, keepdims=True))
            return f / (n + EPS)

        d = (feats(pool(in0_nchw)) - feats(pool(in1_nchw))) ** 2            # (B, C, P)
        for j, kk in enumerate(g["layer_idxs"]):
            c0, c1 = g["seg_bounds"][j]
            lin = jnp.sum(d[:, c0:c1, :] * wl[None, c0:c1, None], axis=1)   # (B, P)
            res[kk] = jnp.sum(lin * g["wsp"], axis=-1).reshape(B, 1, 1, 1)
    val = res[0]
    for l in range(1, len(ALEX_CHNS)):
        val = val + res[l]
    return val, res


# ----------------------------------- main -------------------------------------

if __name__ == "__main__":
    key = jax.random.PRNGKey(0)
    k0, k1, kp = jax.random.split(key, 3)
    B, C, H, W = 2, 3, 16, 16
    in0 = jax.random.uniform(k0, (B, C, H, W), jnp.float32, minval=-1.0, maxval=1.0)
    in1 = jax.random.uniform(k1, (B, C, H, W), jnp.float32, minval=-1.0, maxval=1.0)
    params = make_params(H, W, kp)

    val, res = lpips_forward(in0, in1, params, normalize=False, retPerLayer=True)
    val = jax.block_until_ready(val)

    assert val.shape == (B, 1, 1, 1)
    assert len(res) == len(ALEX_CHNS) and all(r.shape == (B, 1, 1, 1) for r in res)
    assert bool(jnp.all(jnp.isfinite(val)))

    # Validate against a pure-jnp reference of the same math (rsqrt vs sqrt+eps and the
    # tiled accumulation only introduce tiny numeric differences).
    val_ref, res_ref = lpips_reference(in0, in1, params, normalize=False)
    np.testing.assert_allclose(np.asarray(val), np.asarray(val_ref), rtol=1e-2, atol=1e-6)
    for r, rr in zip(res, res_ref):
        np.testing.assert_allclose(np.asarray(r), np.asarray(rr), rtol=1e-2, atol=1e-6)

    print("KERNEL_OK")
</pallas_src>

<mosaic_0001>
module attributes {stable_mosaic.version = 11 : i64} {
  func.func @kernel(%arg0: i32, %arg1: i32, %arg2: memref<1x2x3x256xf32, #tpu.memory_space<vmem>>, %arg3: memref<64x8xf32, #tpu.memory_space<vmem>>, %arg4: memref<1x256xf32, #tpu.memory_space<vmem>>, %arg5: memref<1x1x1xf32, #tpu.memory_space<vmem>>, %arg6: memref<1x1xf32, #tpu.memory_space<vmem>>) attributes {dimension_semantics = [#tpu.dimension_semantics<parallel>, #tpu.dimension_semantics<arbitrary>], iteration_bounds = array<i64: 2, 1>, scalar_prefetch = 0 : i64, scratch_operands = 1 : i64, tpu.core_type = #tpu.core_type<tc>, window_params = [{transform_indices = @transform_0, window_bounds = array<i64: 1, 2, 3, 256>}, {pipeline_mode = #tpu.pipeline_mode<synchronous>, transform_indices = @transform_1, window_bounds = array<i64: 64, 8>}, {transform_indices = @transform_2, window_bounds = array<i64: 1, 256>}, {transform_indices = @transform_3, window_bounds = array<i64: 1, 1, 1>}]} {
    %c0_i32 = arith.constant 0 : i32
    %0 = arith.cmpi eq, %arg1, %c0_i32 : i32
    %1 = arith.extui %0 : i1 to i32
    %c0_i32_0 = arith.constant 0 : i32
    %2 = arith.cmpi ne, %1, %c0_i32_0 : i32
    scf.if %2 {
      %cst_21 = arith.constant 0.000000e+00 : f32
      %83 = vector.broadcast %cst_21 : f32 to vector<1x1xf32>
      %c0_22 = arith.constant 0 : index
      %c0_23 = arith.constant 0 : index
      %84 = vector.load %arg6[%c0_22, %c0_23] : memref<1x1xf32, #tpu.memory_space<vmem>>, vector<1x1xf32>
      tpu.vector_store %arg6[%c0_22, %c0_23], %83 {strides = array<i32>} : memref<1x1xf32, #tpu.memory_space<vmem>>, vector<1x1xf32>,
    } else {
    }
    %c0 = arith.constant 0 : index
    %c0_1 = arith.constant 0 : index
    %3 = vector.load %arg3[%c0, %c0_1] : memref<64x8xf32, #tpu.memory_space<vmem>>, vector<64x8xf32>
    %4 = vector.extract_strided_slice %3 {offsets = [0, 0], sizes = [64, 1], strides = [1, 1]} : vector<64x8xf32> to vector<64x1xf32>
    %5 = vector.extract_strided_slice %3 {offsets = [0, 1], sizes = [64, 1], strides = [1, 1]} : vector<64x8xf32> to vector<64x1xf32>
    %6 = vector.extract_strided_slice %3 {offsets = [0, 2], sizes = [64, 1], strides = [1, 1]} : vector<64x8xf32> to vector<64x1xf32>
    %7 = vector.extract_strided_slice %3 {offsets = [0, 3], sizes = [64, 1], strides = [1, 1]} : vector<64x8xf32> to vector<64x1xf32>
    %8 = vector.extract_strided_slice %3 {offsets = [0, 4], sizes = [64, 1], strides = [1, 1]} : vector<64x8xf32> to vector<64x1xf32>
    %c0_2 = arith.constant 0 : index
    %c0_3 = arith.constant 0 : index
    %c0_4 = arith.constant 0 : index
    %c0_5 = arith.constant 0 : index
    %9 = vector.load %arg2[%c0_2, %c0_3, %c0_4, %c0_5] : memref<1x2x3x256xf32, #tpu.memory_space<vmem>>, vector<1x2x3x256xf32>
    %10 = vector.shape_cast %9 : vector<1x2x3x256xf32> to vector<2x3x256xf32>
    %11 = vector.extract_strided_slice %10 {offsets = [0, 0, 0], sizes = [1, 3, 256], strides = [1, 1, 1]} : vector<2x3x256xf32> to vector<1x3x256xf32>
    %12 = vector.shape_cast %11 : vector<1x3x256xf32> to vector<3x256xf32>
    %13 = vector.extract_strided_slice %12 {offsets = [0, 0], sizes = [1, 256], strides = [1, 1]} : vector<3x256xf32> to vector<1x256xf32>
    %14 = vector.broadcast %4 : vector<64x1xf32> to vector<64x256xf32>
    %15 = vector.broadcast %13 : vector<1x256xf32> to vector<64x256xf32>
    %16 = arith.mulf %14, %15 : vector<64x256xf32>
    %17 = vector.extract_strided_slice %12 {offsets = [1, 0], sizes = [1, 256], strides = [1, 1]} : vector<3x256xf32> to vector<1x256xf32>
    %18 = vector.broadcast %5 : vector<64x1xf32> to vector<64x256xf32>
    %19 = vector.broadcast %17 : vector<1x256xf32> to vector<64x256xf32>
    %20 = arith.mulf %18, %19 : vector<64x256xf32>
    %21 = arith.addf %16, %20 : vector<64x256xf32>
    %22 = vector.extract_strided_slice %12 {offsets = [2, 0], sizes = [1, 256], strides = [1, 1]} : vector<3x256xf32> to vector<1x256xf32>
    %23 = vector.broadcast %6 : vector<64x1xf32> to vector<64x256xf32>
    %24 = vector.broadcast %22 : vector<1x256xf32> to vector<64x256xf32>
    %25 = arith.mulf %23, %24 : vector<64x256xf32>
    %26 = arith.addf %21, %25 : vector<64x256xf32>
    %27 = vector.broadcast %7 : vector<64x1xf32> to vector<64x256xf32>
    %28 = arith.addf %26, %27 : vector<64x256xf32>
    %cst = arith.constant 0.000000e+00 : f32
    %29 = vector.broadcast %cst : f32 to vector<64x256xf32>
    %30 = arith.maximumf %28, %29 : vector<64x256xf32>
    %31 = arith.mulf %30, %30 : vector<64x256xf32>
    %cst_6 = arith.constant dense<0.000000e+00> : vector<256xf32>
    %32 = vector.multi_reduction <add>, %31, %cst_6 [0] : vector<64x256xf32> to vector<256xf32>
    %33 = vector.shape_cast %32 : vector<256xf32> to vector<1x256xf32>
    %cst_7 = arith.constant 9.99999968E-21 : f32
    %34 = vector.broadcast %cst_7 : f32 to vector<1x256xf32>
    %35 = arith.addf %33, %34 : vector<1x256xf32>
    %36 = math.rsqrt %35 : vector<1x256xf32>
    %37 = vector.broadcast %36 : vector<1x256xf32> to vector<64x256xf32>
    %38 = arith.mulf %30, %37 : vector<64x256xf32>
    %39 = vector.extract_strided_slice %10 {offsets = [1, 0, 0], sizes = [1, 3, 256], strides = [1, 1, 1]} : vector<2x3x256xf32> to vector<1x3x256xf32>
    %40 = vector.shape_cast %39 : vector<1x3x256xf32> to vector<3x256xf32>
    %41 = vector.extract_strided_slice %40 {offsets = [0, 0], sizes = [1, 256], strides = [1, 1]} : vector<3x256xf32> to vector<1x256xf32>
    %42 = vector.broadcast %4 : vector<64x1xf32> to vector<64x256xf32>
    %43 = vector.broadcast %41 : vector<1x256xf32> to vector<64x256xf32>
    %44 = arith.mulf %42, %43 : vector<64x256xf32>
    %45 = vector.extract_strided_slice %40 {offsets = [1, 0], sizes = [1, 256], strides = [1, 1]} : vector<3x256xf32> to vector<1x256xf32>
    %46 = vector.broadcast %5 : vector<64x1xf32> to vector<64x256xf32>
    %47 = vector.broadcast %45 : vector<1x256xf32> to vector<64x256xf32>
    %48 = arith.mulf %46, %47 : vector<64x256xf32>
    %49 = arith.addf %44, %48 : vector<64x256xf32>
    %50 = vector.extract_strided_slice %40 {offsets = [2, 0], sizes = [1, 256], strides = [1, 1]} : vector<3x256xf32> to vector<1x256xf32>
    %51 = vector.broadcast %6 : vector<64x1xf32> to vector<64x256xf32>
    %52 = vector.broadcast %50 : vector<1x256xf32> to vector<64x256xf32>
    %53 = arith.mulf %51, %52 : vector<64x256xf32>
    %54 = arith.addf %49, %53 : vector<64x256xf32>
    %55 = vector.broadcast %7 : vector<64x1xf32> to vector<64x256xf32>
    %56 = arith.addf %54, %55 : vector<64x256xf32>
    %cst_8 = arith.constant 0.000000e+00 : f32
    %57 = vector.broadcast %cst_8 : f32 to vector<64x256xf32>
    %58 = arith.maximumf %56, %57 : vector<64x256xf32>
    %59 = arith.mulf %58, %58 : vector<64x256xf32>
    %cst_9 = arith.constant dense<0.000000e+00> : vector<256xf32>
    %60 = vector.multi_reduction <add>, %59, %cst_9 [0] : vector<64x256xf32> to vector<256xf32>
    %61 = vector.shape_cast %60 : vector<256xf32> to vector<1x256xf32>
    %cst_10 = arith.constant 9.99999968E-21 : f32
    %62 = vector.broadcast %cst_10 : f32 to vector<1x256xf32>
    %63 = arith.addf %61, %62 : vector<1x256xf32>
    %64 = math.rsqrt %63 : vector<1x256xf32>
    %65 = vector.broadcast %64 : vector<1x256xf32> to vector<64x256xf32>
    %66 = arith.mulf %58, %65 : vector<64x256xf32>
    %67 = arith.subf %38, %66 : vector<64x256xf32>
    %68 = arith.mulf %67, %67 : vector<64x256xf32>
    %c0_11 = arith.constant 0 : index
    %c0_12 = arith.constant 0 : index
    %69 = vector.load %arg4[%c0_11, %c0_12] : memref<1x256xf32, #tpu.memory_space<vmem>>, vector<1x256xf32>
    %70 = vector.broadcast %8 : vector<64x1xf32> to vector<64x256xf32>
    %71 = arith.mulf %68, %70 : vector<64x256xf32>
    %cst_13 = arith.constant dense<0.000000e+00> : vector<256xf32>
    %72 = vector.multi_reduction <add>, %71, %cst_13 [0] : vector<64x256xf32> to vector<256xf32>
    %73 = vector.shape_cast %72 : vector<256xf32> to vector<1x256xf32>
    %c0_14 = arith.constant 0 : index
    %c0_15 = arith.constant 0 : index
    %74 = vector.load %arg6[%c0_14, %c0_15] : memref<1x1xf32, #tpu.memory_space<vmem>>, vector<1x1xf32>
    %75 = arith.mulf %73, %69 : vector<1x256xf32>
    %cst_16 = arith.constant dense<0.000000e+00> : vector<1xf32>
    %76 = vector.multi_reduction <add>, %75, %cst_16 [1] : vector<1x256xf32> to vector<1xf32>
    %77 = vector.shape_cast %76 : vector<1xf32> to vector<1x1xf32>
    %78 = arith.addf %74, %77 : vector<1x1xf32>
    %c0_17 = arith.constant 0 : index
    %c0_18 = arith.constant 0 : index
    %79 = vector.load %arg6[%c0_17, %c0_18] : memref<1x1xf32, #tpu.memory_space<vmem>>, vector<1x1xf32>
    tpu.vector_store %arg6[%c0_17, %c0_18], %78 {strides = array<i32>} : memref<1x1xf32, #tpu.memory_space<vmem>>, vector<1x1xf32>,
    %c0_i32_19 = arith.constant 0 : i32
    %80 = arith.cmpi eq, %arg1, %c0_i32_19 : i32
    %81 = arith.extui %80 : i1 to i32
    %c0_i32_20 = arith.constant 0 : i32
    %82 = arith.cmpi ne, %81, %c0_i32_20 : i32
    scf.if %82 {
      %c0_21 = arith.constant 0 : index
      %c0_22 = arith.constant 0 : index
      %83 = vector.load %arg6[%c0_21, %c0_22] : memref<1x1xf32, #tpu.memory_space<vmem>>, vector<1x1xf32>
      %c0_23 = arith.constant 0 : index
      %c0_24 = arith.constant 0 : index
      %c0_25 = arith.constant 0 : index
      %84 = vector.load %arg5[%c0_23, %c0_24, %c0_25] : memref<1x1x1xf32, #tpu.memory_space<vmem>>, vector<1x1x1xf32>
      %85 = vector.shape_cast %84 : vector<1x1x1xf32> to vector<1x1xf32>
      %86 = vector.shape_cast %83 : vector<1x1xf32> to vector<1x1x1xf32>
      tpu.vector_store %arg5[%c0_23, %c0_24, %c0_25], %86 {strides = array<i32>} : memref<1x1x1xf32, #tpu.memory_space<vmem>>, vector<1x1x1xf32>,
    } else {
    }
    return
  }
  func.func @transform_0(%arg0: i32, %arg1: i32) -> (i32, i32, i32, i32) {
    %c0_i32 = arith.constant 0 : i32
    %c0_i32_0 = arith.constant 0 : i32
    %c0_i32_1 = arith.constant 0 : i32
    return %arg0, %c0_i32, %c0_i32_0, %arg1 : i32, i32, i32, i32
  }
  func.func @transform_1(%arg0: i32, %arg1: i32) -> (i32, i32) {
    %c0_i32 = arith.constant 0 : i32
    %c0_i32_0 = arith.constant 0 : i32
    %c0_i32_1 = arith.constant 0 : i32
    return %c0_i32, %c0_i32_0 : i32, i32
  }
  func.func @transform_2(%arg0: i32, %arg1: i32) -> (i32, i32) {
    %c0_i32 = arith.constant 0 : i32
    %c0_i32_0 = arith.constant 0 : i32
    return %c0_i32, %arg1 : i32, i32
  }
  func.func @transform_3(%arg0: i32, %arg1: i32) -> (i32, i32, i32) {
    %c0_i32 = arith.constant 0 : i32
    %c0_i32_0 = arith.constant 0 : i32
    %c0_i32_1 = arith.constant 0 : i32
    return %arg0, %c0_i32, %c0_i32_0 : i32, i32, i32
  }
}

</mosaic_0001>

<llo_original>
// kernel: tpu_custom_call.1
$region0: #{tpu_custom_call.1}
  #allocation0 [shape = 'u32[]', space=smem, size = 0x4, offset = 0x4, fixed_abs, tag = 'smem constant byte address 0x4 - core index']
  #allocation1 [shape = 'u32[144,128]{1,0:T(1,128)}', space=vmem, size = 0x12000, scoped, tag = 'internal scratch']
  #allocation2 [shape = 'f32[1,1]{1,0:T(1,128)}', space=vmem, size = 0x200, scoped, tag = 'scratch operand']
  %s0 = inlined_call_operand.vmem [shape: f32[2,2,3,256], index: 0, kind: input, shape index: {}]
  %s1 = inlined_call_operand.vmem [shape: f32[64,8], index: 1, kind: input, shape index: {}]
  %s2 = inlined_call_operand.vmem [shape: f32[1,256], index: 2, kind: input, shape index: {}]
  %s3 = inlined_call_operand.vmem [shape: f32[2,1,1], index: 3, kind: output, shape index: {}]
  %s4 = sld [smem:[#allocation0]]
  $region53: #{tpu_custom_call.1} parent=0
    _
  %s6 = ssub.s32 1, %s4
  %s7 = scalar_select 0, %s6, %s4
  loop: start=0, step=1, limit=4
  $region2: #{tpu_custom_call.1} parent=0 // loop_pre_header
    _
  $region3: #{tpu_custom_call.1} parent=0 // loop_header
    %s9 = sphi 0, %s13
    %p10 = scmp.ge.s32.totalorder %s9, 4
    %s16 = sphi 0, %s28
    %s17 = sphi 0, %s24
    %s18 = sphi 0, %s16
    %s19 = sphi 0, %s17
    %s20 = sphi 0, %s18
    %s21 = sphi 0, %s19
    %s33 = sphi 0, %s35
    %s36 = sphi 0, %s33
    %s37 = sphi 0, %s36
    %s53 = sphi 0, %s37
    %s57 = sphi 0, %s57
    %s59 = sphi 0, %s57
    %s60 = sphi 0, %s59
    %s74 = sphi 0, %s60
    %s80 = sphi 0, %s82
    %s83 = sphi 0, %s80
    %s84 = sphi 0, %s83
    %s100 = sphi 0, %s84
    %s106 = sphi 0, %s108
    %s109 = sphi 0, %s106
    %s110 = sphi 0, %s109
    %s126 = sphi 0, %s110
  $region4: #{tpu_custom_call.1} parent=0 // loop_header_branch
    %12 = sbr.rel (%p10) target = $region8
  $region5: #{tpu_custom_call.1} parent=0 // loop_body
    %s14 = ssub.s32 %s9, 1
    %s15 = ssub.s32 %s9, 2
    %s22 = sadd.s32 1, %s17
    %p23 = scmp.ge.s32.totalorder %s22, 1
    %s24 = scalar_select %p23, 0, %s22
    %s25 = sadd.s32 1, %s16
    %s26 = scalar_select %p23, %s25, %s16
    %p27 = scmp.ge.s32.totalorder %s26, 2
    %s28 = scalar_select %p27, 0, %s26
    %s29 = ssub.s32 %s16, %s28
    %s30 = ssub.s32 %s17, %s24
    %s31 = sor.u32 %s29, %s30
    %p32 = scmp.eq.s32.totalorder %s31, 0
    %s34 = sadd.s32 %s33, 1
    %s35 = scalar_select %p32, %s33, %s34
    %p38 = pneg %p32
    %p39 = scmp.eq.s32.totalorder %s9, 1
    %p40 = por %p38, %p39
    %p41 = scmp.ne.s32.totalorder %s33, %s36
    %p42 = scmp.eq.s32.totalorder %s9, 0
    %p43 = por %p41, %p42
    %p44 = scmp.ne.s32.totalorder %s33, %s36
    %p45 = scmp.eq.s32.totalorder %s14, 1
    %p46 = por %p44, %p45
    %p47 = scmp.ne.s32.totalorder %s36, %s37
    %p48 = scmp.eq.s32.totalorder %s14, 0
    %p49 = por %p47, %p48
    %p50 = scmp.ne.s32.totalorder %s36, %s37
    %p51 = scmp.eq.s32.totalorder %s15, 1
    %p52 = por %p50, %p51
    %p54 = scmp.ne.s32.totalorder %s37, %s53
    %p55 = scmp.eq.s32.totalorder %s15, 0
    %p56 = por %p54, %p55
    %s58 = sadd.s32 %s57, 1
    %p61 = scmp.eq.s32.totalorder %s9, 1
    %p62 = scmp.ne.s32.totalorder %s57, %s59
    %p63 = scmp.eq.s32.totalorder %s9, 0
    %p64 = por %p62, %p63
    %p65 = scmp.ne.s32.totalorder %s57, %s59
    %p66 = scmp.eq.s32.totalorder %s14, 1
    %p67 = por %p65, %p66
    %p68 = scmp.ne.s32.totalorder %s59, %s60
    %p69 = scmp.eq.s32.totalorder %s14, 0
    %p70 = por %p68, %p69
    %p71 = scmp.ne.s32.totalorder %s59, %s60
    %p72 = scmp.eq.s32.totalorder %s15, 1
    %p73 = por %p71, %p72
    %p75 = scmp.ne.s32.totalorder %s60, %s74
    %p76 = scmp.eq.s32.totalorder %s15, 0
    %p77 = por %p75, %p76
    %s78 = ssub.s32 %s17, %s24
    %p79 = scmp.eq.s32.totalorder %s78, 0
    %s81 = sadd.s32 %s80, 1
    %s82 = scalar_select %p79, %s80, %s81
    %p85 = pneg %p79
    %p86 = scmp.eq.s32.totalorder %s9, 1
    %p87 = por %p85, %p86
    %p88 = scmp.ne.s32.totalorder %s80, %s83
    %p89 = scmp.eq.s32.totalorder %s9, 0
    %p90 = por %p88, %p89
    %p91 = scmp.ne.s32.totalorder %s80, %s83
    %p92 = scmp.eq.s32.totalorder %s14, 1
    %p93 = por %p91, %p92
    %p94 = scmp.ne.s32.totalorder %s83, %s84
    %p95 = scmp.eq.s32.totalorder %s14, 0
    %p96 = por %p94, %p95
    %p97 = scmp.ne.s32.totalorder %s83, %s84
    %p98 = scmp.eq.s32.totalorder %s15, 1
    %p99 = por %p97, %p98
    %p101 = scmp.ne.s32.totalorder %s84, %s100
    %p102 = scmp.eq.s32.totalorder %s15, 0
    %p103 = por %p101, %p102
    %s104 = ssub.s32 %s16, %s28
    %p105 = scmp.eq.s32.totalorder %s104, 0
    %s107 = sadd.s32 %s106, 1
    %s108 = scalar_select %p105, %s106, %s107
    %p111 = pneg %p105
    %p112 = scmp.eq.s32.totalorder %s9, 1
    %p113 = por %p111, %p112
    %p114 = scmp.ne.s32.totalorder %s106, %s109
    %p115 = scmp.eq.s32.totalorder %s9, 0
    %p116 = por %p114, %p115
    %p117 = scmp.ne.s32.totalorder %s106, %s109
    %p118 = scmp.eq.s32.totalorder %s14, 1
    %p119 = por %p117, %p118
    %p120 = scmp.ne.s32.totalorder %s109, %s110
    %p121 = scmp.eq.s32.totalorder %s14, 0
    %p122 = por %p120, %p121
    %p123 = scmp.ne.s32.totalorder %s109, %s110
    %p124 = scmp.eq.s32.totalorder %s15, 1
    %p125 = por %p123, %p124
    %p127 = scmp.ne.s32.totalorder %s110, %s126
    %p128 = scmp.eq.s32.totalorder %s15, 0
    %p129 = por %p127, %p128
    %p130 = scmp.le.s32.totalorder 1, %s9
    %p131 = scmp.lt.s32.totalorder %s9, 3
    %p132 = pnand %p130, %p131
    %p133 = pneg %p132
    // Predicated region
    $region9: #{tpu_custom_call.1} parent=5 // pred_check
      _
    $region10: #{tpu_custom_call.1} parent=5 // pred_check_branch
      %135 = sbr.rel (%p132) target = $region12
    $region11: #{tpu_custom_call.1} parent=5 // pred_region
      %s136 = ssub.s32 %s9, 1
      // Predicated region
      $region13: #{tpu_custom_call.1} parent=11 // pred_check
        %p137 = pneg %p70
      $region14: #{tpu_custom_call.1} parent=11 // pred_check_branch
        %139 = sbr.rel (%p137) target = $region16
      $region15: #{tpu_custom_call.1} parent=11 // pred_region
        _
      $region16: #{tpu_custom_call.1} parent=11 // pred_fallthru
        _
      // Predicated region
      $region17: #{tpu_custom_call.1} parent=11 // pred_check
        %p140 = pneg %p96
      $region18: #{tpu_custom_call.1} parent=11 // pred_check_branch
        %142 = sbr.rel (%p140) target = $region20
      $region19: #{tpu_custom_call.1} parent=11 // pred_region
        %s143 = smul.u32 2, %s19
        %p144 = scmp.lt.s32.totalorder %s143, 1
        %s145 = scalar_select %p144, %s143, 1
        %s146 = scalar_lea.vmem %s2, %s145
        %s147 = smul.u32 2, %s19
      $region20: #{tpu_custom_call.1} parent=11 // pred_fallthru
        _
    $region12: #{tpu_custom_call.1} parent=5 // pred_fallthru
      _
    %p148 = scmp.lt.s32.totalorder %s9, 2
    // Predicated region
    $region21: #{tpu_custom_call.1} parent=5 // pred_check
      %p149 = pneg %p148
    $region22: #{tpu_custom_call.1} parent=5 // pred_check_branch
      %151 = sbr.rel (%p149) target = $region24
    $region23: #{tpu_custom_call.1} parent=5 // pred_region
      // Predicated region
      $region25: #{tpu_custom_call.1} parent=23 // pred_check
        %p152 = pneg %p43
      $region26: #{tpu_custom_call.1} parent=23 // pred_check_branch
        %154 = sbr.rel (%p152) target = $region28
      $region27: #{tpu_custom_call.1} parent=23 // pred_region
        %s155 = smul.u32 2, %s17
        %p156 = scmp.lt.s32.totalorder %s16, 1
        %s157 = scalar_select %p156, %s16, 1
        %p158 = scmp.lt.s32.totalorder %s155, 1
        %s159 = scalar_select %p158, %s155, 1
        %s160 = smul.addr %s157, 4
        %s161 = sadd.s32 %s159, %s160
        %s162 = smul.addr %s161, 4
        %s163 = scalar_lea.vmem %s0, %s162
        %s164 = smul.u32 2, %s17
      $region28: #{tpu_custom_call.1} parent=23 // pred_fallthru
        _
    $region24: #{tpu_custom_call.1} parent=5 // pred_fallthru
      _
    %p165 = scmp.le.s32.totalorder 1, %s9
    %p166 = scmp.lt.s32.totalorder %s9, 3
    %p167 = pnand %p165, %p166
    %p168 = pneg %p167
    // Predicated region
    $region29: #{tpu_custom_call.1} parent=5 // pred_check
      _
    $region30: #{tpu_custom_call.1} parent=5 // pred_check_branch
      %170 = sbr.rel (%p167) target = $region32
    $region31: #{tpu_custom_call.1} parent=5 // pred_region
      %s171 = ssub.s32 %s9, 1
      %s172 = smul.u32 2, %s19
      %p173 = scmp.lt.s32.totalorder %s18, 1
      %s174 = scalar_select %p173, %s18, 1
      %p175 = scmp.lt.s32.totalorder %s172, 1
      %s176 = scalar_select %p175, %s172, 1
      %s177 = smul.addr %s174, 4
      %s178 = sadd.s32 %s176, %s177
      %s179 = smul.addr %s178, 4
      %s180 = scalar_lea.vmem %s0, %s179
      %p181 = pneg %p49
      %p182 = pneg %p46
      %p183 = pneg %p70
      %p184 = pneg %p67
      %s185 = smul.u32 2, %s19
      %p186 = scmp.lt.s32.totalorder %s185, 1
      %s187 = scalar_select %p186, %s185, 1
      %s188 = scalar_lea.vmem %s2, %s187
      %p189 = pneg %p96
      %p190 = pneg %p93
      %p191 = pneg %p122
      %p192 = pneg %p119
      %p193 = scmp.lt.s32.totalorder %s18, 1
      %s194 = scalar_select %p193, %s18, 1
      %s195 = scalar_lea.vmem %s3, %s194
      %s196 = smul.u32 2, %s19
      %p197 = scmp.lt.s32.totalorder %s18, 1
      %s198 = scalar_select %p197, %s18, 1
      %p199 = scmp.lt.s32.totalorder %s196, 1
      %s200 = scalar_select %p199, %s196, 1
      %s201 = smul.addr %s198, 4
      %s202 = sadd.s32 %s200, %s201
      %s203 = smul.addr %s202, 4
      %s204 = scalar_lea.vmem %s0, %s203
      %s205 = smul.u32 2, %s19
      %s206 = smul.u32 2, %s19
      %p207 = scmp.lt.s32.totalorder %s206, 1
      %s208 = scalar_select %p207, %s206, 1
      %s209 = scalar_lea.vmem %s2, %s208
      %s210 = smul.u32 2, %s19
      %p211 = scmp.lt.s32.totalorder %s18, 1
      %s212 = scalar_select %p211, %s18, 1
      %s213 = scalar_lea.vmem %s3, %s212
      %p214 = scmp.eq.s32.totalorder %s19, 0
      // Predicated region
      $region33: #{tpu_custom_call.1} parent=31 // pred_check
        %p215 = pneg %p214
      $region34: #{tpu_custom_call.1} parent=31 // pred_check_branch
        %217 = sbr.rel (%p215) target = $region36
      $region35: #{tpu_custom_call.1} parent=31 // pred_region
        %vm218 = vcmask 0
        %219 = vst.msk [vmem:[#allocation2] sm:$0x1] %vm218, 0.0
      $region36: #{tpu_custom_call.1} parent=31 // pred_fallthru
        _
      %v220 = vld [vmem:[%s1] sm:$0xff]
      %v221 = vld [vmem:[%s1 + $0x8] sm:$0xff]
      %v222 = vld [vmem:[%s1 + $0x10] sm:$0xff]
      %v223 = vld [vmem:[%s1 + $0x18] sm:$0xff]
      %v224 = vld [vmem:[%s1 + $0x20] sm:$0xff]
      %v225 = vld [vmem:[%s1 + $0x28] sm:$0xff]
      %v226 = vld [vmem:[%s1 + $0x30] sm:$0xff]
      %v227 = vld [vmem:[%s1 + $0x38] sm:$0xff]
      %v228 = vld [vmem:[%s204] sm:$0x77]
      %v229 = vld [vmem:[%s204 + $0x8] sm:$0x77]
      %231 = vset.pattern.permute.xlu0 0
      %232 = vperm.xlu0 %231, %v220
      %v233 = vpop.permute.xlu0 %232
      %236 = vset.pattern.permute.xlu0 0
      %237 = vperm.xlu0 %236, %v221
      %v238 = vpop.permute.xlu0 %237
      %241 = vset.pattern.permute.xlu0 0
      %242 = vperm.xlu0 %241, %v222
      %v243 = vpop.permute.xlu0 %242
      %246 = vset.pattern.permute.xlu0 0
      %247 = vperm.xlu0 %246, %v223
      %v248 = vpop.permute.xlu0 %247
      %251 = vset.pattern.permute.xlu0 0
      %252 = vperm.xlu0 %251, %v224
      %v253 = vpop.permute.xlu0 %252
      %256 = vset.pattern.permute.xlu0 0
      %257 = vperm.xlu0 %256, %v225
      %v258 = vpop.permute.xlu0 %257
      %261 = vset.pattern.permute.xlu0 0
      %262 = vperm.xlu0 %261, %v226
      %v263 = vpop.permute.xlu0 %262
      %266 = vset.pattern.permute.xlu0 0
      %267 = vperm.xlu0 %266, %v227
      %v268 = vpop.permute.xlu0 %267
      %v271 = vlaneseq
      %v272 = vshrl.u32 %v271, 7
      %v273 = vsub.s32 0, %v272
      %v274 = vrot.slane %v228, %v273
      %v275 = vlaneseq
      %v276 = vshrl.u32 %v275, 7
      %v277 = vsub.s32 4, %v276
      %v278 = vrot.slane %v228, %v277
      %v281 = vlaneseq
      %v282 = vshrl.u32 %v281, 7
      %v283 = vsub.s32 0, %v282
      %v284 = vrot.slane %v274, %v283
      %v285 = vlaneseq
      %v286 = vshrl.u32 %v285, 7
      %v287 = vsub.s32 0, %v286
      %v288 = vrot.slane %v278, %v287
      %v289 = vmul.f32 %v233, %v284
      %v290 = vmul.f32 %v233, %v288
      %v291 = vmul.f32 %v238, %v284
      %v292 = vmul.f32 %v238, %v288
      %v293 = vmul.f32 %v243, %v284
      %v294 = vmul.f32 %v243, %v288
      %v295 = vmul.f32 %v248, %v284
      %v296 = vmul.f32 %v248, %v288
      %v297 = vmul.f32 %v253, %v284
      %v298 = vmul.f32 %v253, %v288
      %v299 = vmul.f32 %v258, %v284
      %v300 = vmul.f32 %v258, %v288
      %v301 = vmul.f32 %v263, %v284
      %v302 = vmul.f32 %v263, %v288
      %v303 = vmul.f32 %v268, %v284
      %v304 = vmul.f32 %v268, %v288
      %305 = vset.pattern.permute.xlu0 1
      %306 = vperm.xlu0 %305, %v220
      %v307 = vpop.permute.xlu0 %306
      %309 = vset.pattern.permute.xlu0 1
      %310 = vperm.xlu0 %309, %v221
      %v311 = vpop.permute.xlu0 %310
      %313 = vset.pattern.permute.xlu0 1
      %314 = vperm.xlu0 %313, %v222
      %v315 = vpop.permute.xlu0 %314
      %317 = vset.pattern.permute.xlu0 1
      %318 = vperm.xlu0 %317, %v223
      %v319 = vpop.permute.xlu0 %318
      %321 = vset.pattern.permute.xlu0 1
      %322 = vperm.xlu0 %321, %v224
      %v323 = vpop.permute.xlu0 %322
      %325 = vset.pattern.permute.xlu0 1
      %326 = vperm.xlu0 %325, %v225
      %v327 = vpop.permute.xlu0 %326
      %329 = vset.pattern.permute.xlu0 1
      %330 = vperm.xlu0 %329, %v226
      %v331 = vpop.permute.xlu0 %330
      %333 = vset.pattern.permute.xlu0 1
      %334 = vperm.xlu0 %333, %v227
      %v335 = vpop.permute.xlu0 %334
      %v337 = vlaneseq
      %v338 = vshrl.u32 %v337, 7
      %v339 = vsub.s32 1, %v338
      %v340 = vrot.slane %v228, %v339
      %v341 = vlaneseq
      %v342 = vshrl.u32 %v341, 7
      %v343 = vsub.s32 5, %v342
      %v344 = vrot.slane %v228, %v343
      %v347 = vlaneseq
      %v348 = vshrl.u32 %v347, 7
      %v349 = vsub.s32 1, %v348
      %v350 = vrot.slane %v340, %v349
      %v351 = vlaneseq
      %v352 = vshrl.u32 %v351, 7
      %v353 = vsub.s32 1, %v352
      %v354 = vrot.slane %v344, %v353
      %v355 = vmul.f32 %v307, %v350
      %v356 = vmul.f32 %v307, %v354
      %v357 = vmul.f32 %v311, %v350
      %v358 = vmul.f32 %v311, %v354
      %v359 = vmul.f32 %v315, %v350
      %v360 = vmul.f32 %v315, %v354
      %v361 = vmul.f32 %v319, %v350
      %v362 = vmul.f32 %v319, %v354
      %v363 = vmul.f32 %v323, %v350
      %v364 = vmul.f32 %v323, %v354
      %v365 = vmul.f32 %v327, %v350
      %v366 = vmul.f32 %v327, %v354
      %v367 = vmul.f32 %v331, %v350
      %v368 = vmul.f32 %v331, %v354
      %v369 = vmul.f32 %v335, %v350
      %v370 = vmul.f32 %v335, %v354
      %v371 = vadd.f32 %v289, %v355
      %v372 = vadd.f32 %v290, %v356
      %v373 = vadd.f32 %v291, %v357
      %v374 = vadd.f32 %v292, %v358
      %v375 = vadd.f32 %v293, %v359
      %v376 = vadd.f32 %v294, %v360
      %v377 = vadd.f32 %v295, %v361
      %v378 = vadd.f32 %v296, %v362
      %v379 = vadd.f32 %v297, %v363
      %v380 = vadd.f32 %v298, %v364
      %v381 = vadd.f32 %v299, %v365
      %v382 = vadd.f32 %v300, %v366
      %v383 = vadd.f32 %v301, %v367
      %v384 = vadd.f32 %v302, %v368
      %v385 = vadd.f32 %v303, %v369
      %v386 = vadd.f32 %v304, %v370
      %387 = vset.pattern.permute.xlu0 2
      %388 = vperm.xlu0 %387, %v220
      %v389 = vpop.permute.xlu0 %388
      %391 = vset.pattern.permute.xlu0 2
      %392 = vperm.xlu0 %391, %v221
      %v393 = vpop.permute.xlu0 %392
      %395 = vset.pattern.permute.xlu0 2
      %396 = vperm.xlu0 %395, %v222
      %v397 = vpop.permute.xlu0 %396
      %399 = vset.pattern.permute.xlu0 2
      %400 = vperm.xlu0 %399, %v223
      %v401 = vpop.permute.xlu0 %400
      %403 = vset.pattern.permute.xlu0 2
      %404 = vperm.xlu0 %403, %v224
      %v405 = vpop.permute.xlu0 %404
      %407 = vset.pattern.permute.xlu0 2
      %408 = vperm.xlu0 %407, %v225
      %v409 = vpop.permute.xlu0 %408
      %411 = vset.pattern.permute.xlu0 2
      %412 = vperm.xlu0 %411, %v226
      %v413 = vpop.permute.xlu0 %412
      %415 = vset.pattern.permute.xlu0 2
      %416 = vperm.xlu0 %415, %v227
      %v417 = vpop.permute.xlu0 %416
      %v419 = vlaneseq
      %v420 = vshrl.u32 %v419, 7
      %v421 = vsub.s32 2, %v420
      %v422 = vrot.slane %v228, %v421
      %v423 = vlaneseq
      %v424 = vshrl.u32 %v423, 7
      %v425 = vsub.s32 6, %v424
      %v426 = vrot.slane %v228, %v425
      %v429 = vlaneseq
      %v430 = vshrl.u32 %v429, 7
      %v431 = vsub.s32 2, %v430
      %v432 = vrot.slane %v422, %v431
      %v433 = vlaneseq
      %v434 = vshrl.u32 %v433, 7
      %v435 = vsub.s32 2, %v434
      %v436 = vrot.slane %v426, %v435
      %v437 = vmul.f32 %v389, %v432
      %v438 = vmul.f32 %v389, %v436
      %v439 = vmul.f32 %v393, %v432
      %v440 = vmul.f32 %v393, %v436
      %v441 = vmul.f32 %v397, %v432
      %v442 = vmul.f32 %v397, %v436
      %v443 = vmul.f32 %v401, %v432
      %v444 = vmul.f32 %v401, %v436
      %v445 = vmul.f32 %v405, %v432
      %v446 = vmul.f32 %v405, %v436
      %v447 = vmul.f32 %v409, %v432
      %v448 = vmul.f32 %v409, %v436
      %v449 = vmul.f32 %v413, %v432
      %v450 = vmul.f32 %v413, %v436
      %v451 = vmul.f32 %v417, %v432
      %v452 = vmul.f32 %v417, %v436
      %v453 = vadd.f32 %v371, %v437
      %v454 = vadd.f32 %v372, %v438
      %v455 = vadd.f32 %v373, %v439
      %v456 = vadd.f32 %v374, %v440
      %v457 = vadd.f32 %v375, %v441
      %v458 = vadd.f32 %v376, %v442
      %v459 = vadd.f32 %v377, %v443
      %v460 = vadd.f32 %v378, %v444
      %v461 = vadd.f32 %v379, %v445
      %v462 = vadd.f32 %v380, %v446
      %v463 = vadd.f32 %v381, %v447
      %v464 = vadd.f32 %v382, %v448
      %v465 = vadd.f32 %v383, %v449
      %v466 = vadd.f32 %v384, %v450
      %v467 = vadd.f32 %v385, %v451
      %v468 = vadd.f32 %v386, %v452
      %469 = vset.pattern.permute.xlu0 3
      %470 = vperm.xlu0 %469, %v220
      %v471 = vpop.permute.xlu0 %470
      %473 = vset.pattern.permute.xlu0 3
      %474 = vperm.xlu0 %473, %v221
      %v475 = vpop.permute.xlu0 %474
      %477 = vset.pattern.permute.xlu0 3
      %478 = vperm.xlu0 %477, %v222
      %v479 = vpop.permute.xlu0 %478
      %481 = vset.pattern.permute.xlu0 3
      %482 = vperm.xlu0 %481, %v223
      %v483 = vpop.permute.xlu0 %482
      %485 = vset.pattern.permute.xlu0 3
      %486 = vperm.xlu0 %485, %v224
      %v487 = vpop.permute.xlu0 %486
      %489 = vset.pattern.permute.xlu0 3
      %490 = vperm.xlu0 %489, %v225
      %v491 = vpop.permute.xlu0 %490
      %493 = vset.pattern.permute.xlu0 3
      %494 = vperm.xlu0 %493, %v226
      %v495 = vpop.permute.xlu0 %494
      %497 = vset.pattern.permute.xlu0 3
      %498 = vperm.xlu0 %497, %v227
      %v499 = vpop.permute.xlu0 %498
      %v501 = vadd.f32 %v453, %v471
      %v502 = vadd.f32 %v454, %v471
      %v503 = vadd.f32 %v455, %v475
      %v504 = vadd.f32 %v456, %v475
      %v505 = vadd.f32 %v457, %v479
      %v506 = vadd.f32 %v458, %v479
      %v507 = vadd.f32 %v459, %v483
      %v508 = vadd.f32 %v460, %v483
      %v509 = vadd.f32 %v461, %v487
      %v510 = vadd.f32 %v462, %v487
      %v511 = vadd.f32 %v463, %v491
      %v512 = vadd.f32 %v464, %v491
      %v513 = vadd.f32 %v465, %v495
      %v514 = vadd.f32 %v466, %v495
      %v515 = vadd.f32 %v467, %v499
      %v516 = vadd.f32 %v468, %v499
      %v517 = vmax.f32 %v501, 0.0
      %v518 = vmax.f32 %v502, 0.0
      %v519 = vmax.f32 %v503, 0.0
      %v520 = vmax.f32 %v504, 0.0
      %v521 = vmax.f32 %v505, 0.0
      %v522 = vmax.f32 %v506, 0.0
      %v523 = vmax.f32 %v507, 0.0
      %v524 = vmax.f32 %v508, 0.0
      %v525 = vmax.f32 %v509, 0.0
      %v526 = vmax.f32 %v510, 0.0
      %v527 = vmax.f32 %v511, 0.0
      %v528 = vmax.f32 %v512, 0.0
      %v529 = vmax.f32 %v513, 0.0
      %v530 = vmax.f32 %v514, 0.0
      %v531 = vmax.f32 %v515, 0.0
      %v532 = vmax.f32 %v516, 0.0
      %v533 = vmul.f32 %v517, %v517
      %v534 = vmul.f32 %v518, %v518
      %v535 = vmul.f32 %v519, %v519
      %v536 = vmul.f32 %v520, %v520
      %v537 = vmul.f32 %v521, %v521
      %v538 = vmul.f32 %v522, %v522
      %v539 = vmul.f32 %v523, %v523
      %v540 = vmul.f32 %v524, %v524
      %v541 = vmul.f32 %v525, %v525
      %v542 = vmul.f32 %v526, %v526
      %v543 = vmul.f32 %v527, %v527
      %v544 = vmul.f32 %v528, %v528
      %v545 = vmul.f32 %v529, %v529
      %v546 = vmul.f32 %v530, %v530
      %v547 = vmul.f32 %v531, %v531
      %v548 = vmul.f32 %v532, %v532
      %v549 = vadd.f32 %v533, %v535
      %v550 = vadd.f32 %v549, %v537
      %v551 = vadd.f32 %v550, %v539
      %v552 = vadd.f32 %v551, %v541
      %v553 = vadd.f32 %v552, %v543
      %v554 = vadd.f32 %v553, %v545
      %v555 = vadd.f32 %v554, %v547
      %v556 = vrot.slane %v555, 4
      %v557 = vadd.f32 %v555, %v556
      %v558 = vrot.slane %v557, 2
      %v559 = vadd.f32 %v557, %v558
      %v560 = vrot.slane %v559, 1
      %v561 = vadd.f32 %v559, %v560
      %v562 = vadd.f32 %v534, %v536
      %v563 = vadd.f32 %v562, %v538
      %v564 = vadd.f32 %v563, %v540
      %v565 = vadd.f32 %v564, %v542
      %v566 = vadd.f32 %v565, %v544
      %v567 = vadd.f32 %v566, %v546
      %v568 = vadd.f32 %v567, %v548
      %v569 = vrot.slane %v568, 4
      %v570 = vadd.f32 %v568, %v569
      %v571 = vrot.slane %v570, 2
      %v572 = vadd.f32 %v570, %v571
      %v573 = vrot.slane %v572, 1
      %v574 = vadd.f32 %v572, %v573
      %v575 = vadd.f32 %v561, 1e-20
      %v576 = vadd.f32 %v574, 1e-20
      %v577 = vrsqrt.pop %v575
      %v578 = vrsqrt.pop %v576
      %v579 = vmul.f32 %v517, %v577
      %v580 = vmul.f32 %v518, %v578
      %v581 = vmul.f32 %v519, %v577
      %v582 = vmul.f32 %v520, %v578
      %v583 = vmul.f32 %v521, %v577
      %v584 = vmul.f32 %v522, %v578
      %v585 = vmul.f32 %v523, %v577
      %v586 = vmul.f32 %v524, %v578
      %v587 = vmul.f32 %v525, %v577
      %v588 = vmul.f32 %v526, %v578
      %v589 = vmul.f32 %v527, %v577
      %v590 = vmul.f32 %v528, %v578
      %v591 = vmul.f32 %v529, %v577
      %v592 = vmul.f32 %v530, %v578
      %v593 = vmul.f32 %v531, %v577
      %v594 = vmul.f32 %v532, %v578
      %v596 = vlaneseq
      %v597 = vshrl.u32 %v596, 7
      %v598 = vsub.s32 0, %v597
      %v599 = vrot.slane %v229, %v598
      %v600 = vlaneseq
      %v601 = vshrl.u32 %v600, 7
      %v602 = vsub.s32 4, %v601
      %v603 = vrot.slane %v229, %v602
      %v606 = vlaneseq
      %v607 = vshrl.u32 %v606, 7
      %v608 = vsub.s32 0, %v607
      %v609 = vrot.slane %v599, %v608
      %v610 = vlaneseq
      %v611 = vshrl.u32 %v610, 7
      %v612 = vsub.s32 0, %v611
      %v613 = vrot.slane %v603, %v612
      %v614 = vmul.f32 %v233, %v609
      %v615 = vmul.f32 %v233, %v613
      %v616 = vmul.f32 %v238, %v609
      %v617 = vmul.f32 %v238, %v613
      %v618 = vmul.f32 %v243, %v609
      %v619 = vmul.f32 %v243, %v613
      %v620 = vmul.f32 %v248, %v609
      %v621 = vmul.f32 %v248, %v613
      %v622 = vmul.f32 %v253, %v609
      %v623 = vmul.f32 %v253, %v613
      %v624 = vmul.f32 %v258, %v609
      %v625 = vmul.f32 %v258, %v613
      %v626 = vmul.f32 %v263, %v609
      %v627 = vmul.f32 %v263, %v613
      %v628 = vmul.f32 %v268, %v609
      %v629 = vmul.f32 %v268, %v613
      %v630 = vlaneseq
      %v631 = vshrl.u32 %v630, 7
      %v632 = vsub.s32 1, %v631
      %v633 = vrot.slane %v229, %v632
      %v634 = vlaneseq
      %v635 = vshrl.u32 %v634, 7
      %v636 = vsub.s32 5, %v635
      %v637 = vrot.slane %v229, %v636
      %v640 = vlaneseq
      %v641 = vshrl.u32 %v640, 7
      %v642 = vsub.s32 1, %v641
      %v643 = vrot.slane %v633, %v642
      %v644 = vlaneseq
      %v645 = vshrl.u32 %v644, 7
      %v646 = vsub.s32 1, %v645
      %v647 = vrot.slane %v637, %v646
      %v648 = vmul.f32 %v307, %v643
      %v649 = vmul.f32 %v307, %v647
      %v650 = vmul.f32 %v311, %v643
      %v651 = vmul.f32 %v311, %v647
      %v652 = vmul.f32 %v315, %v643
      %v653 = vmul.f32 %v315, %v647
      %v654 = vmul.f32 %v319, %v643
      %v655 = vmul.f32 %v319, %v647
      %v656 = vmul.f32 %v323, %v643
      %v657 = vmul.f32 %v323, %v647
      %v658 = vmul.f32 %v327, %v643
      %v659 = vmul.f32 %v327, %v647
      %v660 = vmul.f32 %v331, %v643
      %v661 = vmul.f32 %v331, %v647
      %v662 = vmul.f32 %v335, %v643
      %v663 = vmul.f32 %v335, %v647
      %v664 = vadd.f32 %v614, %v648
      %v665 = vadd.f32 %v615, %v649
      %v666 = vadd.f32 %v616, %v650
      %v667 = vadd.f32 %v617, %v651
      %v668 = vadd.f32 %v618, %v652
      %v669 = vadd.f32 %v619, %v653
      %v670 = vadd.f32 %v620, %v654
      %v671 = vadd.f32 %v621, %v655
      %v672 = vadd.f32 %v622, %v656
      %v673 = vadd.f32 %v623, %v657
      %v674 = vadd.f32 %v624, %v658
      %v675 = vadd.f32 %v625, %v659
      %v676 = vadd.f32 %v626, %v660
      %v677 = vadd.f32 %v627, %v661
      %v678 = vadd.f32 %v628, %v662
      %v679 = vadd.f32 %v629, %v663
      %v680 = vlaneseq
      %v681 = vshrl.u32 %v680, 7
      %v682 = vsub.s32 2, %v681
      %v683 = vrot.slane %v229, %v682
      %v684 = vlaneseq
      %v685 = vshrl.u32 %v684, 7
      %v686 = vsub.s32 6, %v685
      %v687 = vrot.slane %v229, %v686
      %v690 = vlaneseq
      %v691 = vshrl.u32 %v690, 7
      %v692 = vsub.s32 2, %v691
      %v693 = vrot.slane %v683, %v692
      %v694 = vlaneseq
      %v695 = vshrl.u32 %v694, 7
      %v696 = vsub.s32 2, %v695
      %v697 = vrot.slane %v687, %v696
      %v698 = vmul.f32 %v389, %v693
      %v699 = vmul.f32 %v389, %v697
      %v700 = vmul.f32 %v393, %v693
      %v701 = vmul.f32 %v393, %v697
      %v702 = vmul.f32 %v397, %v693
      %v703 = vmul.f32 %v397, %v697
      %v704 = vmul.f32 %v401, %v693
      %v705 = vmul.f32 %v401, %v697
      %v706 = vmul.f32 %v405, %v693
      %v707 = vmul.f32 %v405, %v697
      %v708 = vmul.f32 %v409, %v693
      %v709 = vmul.f32 %v409, %v697
      %v710 = vmul.f32 %v413, %v693
      %v711 = vmul.f32 %v413, %v697
      %v712 = vmul.f32 %v417, %v693
      %v713 = vmul.f32 %v417, %v697
      %v714 = vadd.f32 %v664, %v698
      %v715 = vadd.f32 %v665, %v699
      %v716 = vadd.f32 %v666, %v700
      %v717 = vadd.f32 %v667, %v701
      %v718 = vadd.f32 %v668, %v702
      %v719 = vadd.f32 %v669, %v703
      %v720 = vadd.f32 %v670, %v704
      %v721 = vadd.f32 %v671, %v705
      %v722 = vadd.f32 %v672, %v706
      %v723 = vadd.f32 %v673, %v707
      %v724 = vadd.f32 %v674, %v708
      %v725 = vadd.f32 %v675, %v709
      %v726 = vadd.f32 %v676, %v710
      %v727 = vadd.f32 %v677, %v711
      %v728 = vadd.f32 %v678, %v712
      %v729 = vadd.f32 %v679, %v713
      %v730 = vadd.f32 %v714, %v471
      %v731 = vadd.f32 %v715, %v471
      %v732 = vadd.f32 %v716, %v475
      %v733 = vadd.f32 %v717, %v475
      %v734 = vadd.f32 %v718, %v479
      %v735 = vadd.f32 %v719, %v479
      %v736 = vadd.f32 %v720, %v483
      %v737 = vadd.f32 %v721, %v483
      %v738 = vadd.f32 %v722, %v487
      %v739 = vadd.f32 %v723, %v487
      %v740 = vadd.f32 %v724, %v491
      %v741 = vadd.f32 %v725, %v491
      %v742 = vadd.f32 %v726, %v495
      %v743 = vadd.f32 %v727, %v495
      %v744 = vadd.f32 %v728, %v499
      %v745 = vadd.f32 %v729, %v499
      %v746 = vmax.f32 %v730, 0.0
      %v747 = vmax.f32 %v731, 0.0
      %v748 = vmax.f32 %v732, 0.0
      %v749 = vmax.f32 %v733, 0.0
      %v750 = vmax.f32 %v734, 0.0
      %v751 = vmax.f32 %v735, 0.0
      %v752 = vmax.f32 %v736, 0.0
      %v753 = vmax.f32 %v737, 0.0
      %v754 = vmax.f32 %v738, 0.0
      %v755 = vmax.f32 %v739, 0.0
      %v756 = vmax.f32 %v740, 0.0
      %v757 = vmax.f32 %v741, 0.0
      %v758 = vmax.f32 %v742, 0.0
      %v759 = vmax.f32 %v743, 0.0
      %v760 = vmax.f32 %v744, 0.0
      %v761 = vmax.f32 %v745, 0.0
      %v762 = vmul.f32 %v746, %v746
      %v763 = vmul.f32 %v747, %v747
      %v764 = vmul.f32 %v748, %v748
      %v765 = vmul.f32 %v749, %v749
      %v766 = vmul.f32 %v750, %v750
      %v767 = vmul.f32 %v751, %v751
      %v768 = vmul.f32 %v752, %v752
      %v769 = vmul.f32 %v753, %v753
      %v770 = vmul.f32 %v754, %v754
      %v771 = vmul.f32 %v755, %v755
      %v772 = vmul.f32 %v756, %v756
      %v773 = vmul.f32 %v757, %v757
      %v774 = vmul.f32 %v758, %v758
      %v775 = vmul.f32 %v759, %v759
      %v776 = vmul.f32 %v760, %v760
      %v777 = vmul.f32 %v761, %v761
      %v778 = vadd.f32 %v762, %v764
      %v779 = vadd.f32 %v778, %v766
      %v780 = vadd.f32 %v779, %v768
      %v781 = vadd.f32 %v780, %v770
      %v782 = vadd.f32 %v781, %v772
      %v783 = vadd.f32 %v782, %v774
      %v784 = vadd.f32 %v783, %v776
      %v785 = vrot.slane %v784, 4
      %v786 = vadd.f32 %v784, %v785
      %v787 = vrot.slane %v786, 2
      %v788 = vadd.f32 %v786, %v787
      %v789 = vrot.slane %v788, 1
      %v790 = vadd.f32 %v788, %v789
      %v791 = vadd.f32 %v763, %v765
      %v792 = vadd.f32 %v791, %v767
      %v793 = vadd.f32 %v792, %v769
      %v794 = vadd.f32 %v793, %v771
      %v795 = vadd.f32 %v794, %v773
      %v796 = vadd.f32 %v795, %v775
      %v797 = vadd.f32 %v796, %v777
      %v798 = vrot.slane %v797, 4
      %v799 = vadd.f32 %v797, %v798
      %v800 = vrot.slane %v799, 2
      %v801 = vadd.f32 %v799, %v800
      %v802 = vrot.slane %v801, 1
      %v803 = vadd.f32 %v801, %v802
      %v804 = vadd.f32 %v790, 1e-20
      %v805 = vadd.f32 %v803, 1e-20
      %v806 = vrsqrt.pop %v804
      %v807 = vrsqrt.pop %v805
      %v808 = vmul.f32 %v746, %v806
      %v809 = vmul.f32 %v747, %v807
      %v810 = vmul.f32 %v748, %v806
      %v811 = vmul.f32 %v749, %v807
      %v812 = vmul.f32 %v750, %v806
      %v813 = vmul.f32 %v751, %v807
      %v814 = vmul.f32 %v752, %v806
      %v815 = vmul.f32 %v753, %v807
      %v816 = vmul.f32 %v754, %v806
      %v817 = vmul.f32 %v755, %v807
      %v818 = vmul.f32 %v756, %v806
      %v819 = vmul.f32 %v757, %v807
      %v820 = vmul.f32 %v758, %v806
      %v821 = vmul.f32 %v759, %v807
      %v822 = vmul.f32 %v760, %v806
      %v823 = vmul.f32 %v761, %v807
      %v824 = vsub.f32 %v579, %v808
      %v825 = vsub.f32 %v580, %v809
      %v826 = vsub.f32 %v581, %v810
      %v827 = vsub.f32 %v582, %v811
      %v828 = vsub.f32 %v583, %v812
      %v829 = vsub.f32 %v584, %v813
      %v830 = vsub.f32 %v585, %v814
      %v831 = vsub.f32 %v586, %v815
      %v832 = vsub.f32 %v587, %v816
      %v833 = vsub.f32 %v588, %v817
      %v834 = vsub.f32 %v589, %v818
      %v835 = vsub.f32 %v590, %v819
      %v836 = vsub.f32 %v591, %v820
      %v837 = vsub.f32 %v592, %v821
      %v838 = vsub.f32 %v593, %v822
      %v839 = vsub.f32 %v594, %v823
      %v840 = vmul.f32 %v824, %v824
      %v841 = vmul.f32 %v825, %v825
      %v842 = vmul.f32 %v826, %v826
      %v843 = vmul.f32 %v827, %v827
      %v844 = vmul.f32 %v828, %v828
      %v845 = vmul.f32 %v829, %v829
      %v846 = vmul.f32 %v830, %v830
      %v847 = vmul.f32 %v831, %v831
      %v848 = vmul.f32 %v832, %v832
      %v849 = vmul.f32 %v833, %v833
      %v850 = vmul.f32 %v834, %v834
      %v851 = vmul.f32 %v835, %v835
      %v852 = vmul.f32 %v836, %v836
      %v853 = vmul.f32 %v837, %v837
      %v854 = vmul.f32 %v838, %v838
      %v855 = vmul.f32 %v839, %v839
      %v856 = vld [vmem:[%s209] sm:$0x3]
      %857 = vset.pattern.permute.xlu0 4
      %858 = vperm.xlu0 %857, %v220
      %v859 = vpop.permute.xlu0 %858
      %861 = vset.pattern.permute.xlu0 4
      %862 = vperm.xlu0 %861, %v221
      %v863 = vpop.permute.xlu0 %862
      %865 = vset.pattern.permute.xlu0 4
      %866 = vperm.xlu0 %865, %v222
      %v867 = vpop.permute.xlu0 %866
      %869 = vset.pattern.permute.xlu0 4
      %870 = vperm.xlu0 %869, %v223
      %v871 = vpop.permute.xlu0 %870
      %873 = vset.pattern.permute.xlu0 4
      %874 = vperm.xlu0 %873, %v224
      %v875 = vpop.permute.xlu0 %874
      %877 = vset.pattern.permute.xlu0 4
      %878 = vperm.xlu0 %877, %v225
      %v879 = vpop.permute.xlu0 %878
      %881 = vset.pattern.permute.xlu0 4
      %882 = vperm.xlu0 %881, %v226
      %v883 = vpop.permute.xlu0 %882
      %885 = vset.pattern.permute.xlu0 4
      %886 = vperm.xlu0 %885, %v227
      %v887 = vpop.permute.xlu0 %886
      %v889 = vmul.f32 %v840, %v859
      %v890 = vmul.f32 %v841, %v859
      %v891 = vmul.f32 %v842, %v863
      %v892 = vmul.f32 %v843, %v863
      %v893 = vmul.f32 %v844, %v867
      %v894 = vmul.f32 %v845, %v867
      %v895 = vmul.f32 %v846, %v871
      %v896 = vmul.f32 %v847, %v871
      %v897 = vmul.f32 %v848, %v875
      %v898 = vmul.f32 %v849, %v875
      %v899 = vmul.f32 %v850, %v879
      %v900 = vmul.f32 %v851, %v879
      %v901 = vmul.f32 %v852, %v883
      %v902 = vmul.f32 %v853, %v883
      %v903 = vmul.f32 %v854, %v887
      %v904 = vmul.f32 %v855, %v887
      %v905 = vadd.f32 %v889, %v891
      %v906 = vadd.f32 %v905, %v893
      %v907 = vadd.f32 %v906, %v895
      %v908 = vadd.f32 %v907, %v897
      %v909 = vadd.f32 %v908, %v899
      %v910 = vadd.f32 %v909, %v901
      %v911 = vadd.f32 %v910, %v903
      %v912 = vrot.slane %v911, 4
      %v913 = vadd.f32 %v911, %v912
      %v914 = vrot.slane %v913, 2
      %v915 = vadd.f32 %v913, %v914
      %v916 = vrot.slane %v915, 1
      %v917 = vadd.f32 %v915, %v916
      %v918 = vadd.f32 %v890, %v892
      %v919 = vadd.f32 %v918, %v894
      %v920 = vadd.f32 %v919, %v896
      %v921 = vadd.f32 %v920, %v898
      %v922 = vadd.f32 %v921, %v900
      %v923 = vadd.f32 %v922, %v902
      %v924 = vadd.f32 %v923, %v904
      %v925 = vrot.slane %v924, 4
      %v926 = vadd.f32 %v924, %v925
      %v927 = vrot.slane %v926, 2
      %v928 = vadd.f32 %v926, %v927
      %v929 = vrot.slane %v928, 1
      %v930 = vadd.f32 %v928, %v929
      %v931 = vld [vmem:[#allocation2] sm:$0x1]
      %v933 = vlaneseq
      %v934 = vshrl.u32 %v933, 7
      %v935 = vsub.s32 0, %v934
      %v936 = vrot.slane %v856, %v935
      %v937 = vlaneseq
      %v938 = vshrl.u32 %v937, 7
      %v939 = vsub.s32 1, %v938
      %v940 = vrot.slane %v856, %v939
      %v943 = vmul.f32 %v917, %v936
      %v944 = vmul.f32 %v930, %v940
      %vm945 = vcmask 1040384
      %v946 = vsel %vm945, %v943, 0.0
      %v947 = vsel %vm945, %v944, 0.0
      %v948 = vadd.f32 %v946, %v947
      %949 = vadd.xlane.f32.xlu0 %v948
      %v950 = vpop.xlane.xlu0 %949
      %v951 = vadd.f32 %v931, %v950
      %vm952 = vcmask 0
      %953 = vst.msk [vmem:[#allocation2] sm:$0x1] %vm952, %v951
      // Predicated region
      $region37: #{tpu_custom_call.1} parent=31 // pred_check
        %p954 = pneg %p214
      $region38: #{tpu_custom_call.1} parent=31 // pred_check_branch
        %956 = sbr.rel (%p954) target = $region40
      $region39: #{tpu_custom_call.1} parent=31 // pred_region
        %v957 = vld [vmem:[#allocation2] sm:$0x1]
        %958 = vst.msk [vmem:[%s213] sm:$0x1] %vm952, %v957
      $region40: #{tpu_custom_call.1} parent=31 // pred_fallthru
        _
      %p959 = scmp.lt.s32.totalorder %s18, 1
      %s960 = scalar_select %p959, %s18, 1
      %s961 = scalar_lea.vmem %s3, %s960
      // Predicated region
      $region41: #{tpu_custom_call.1} parent=31 // pred_check
        %p962 = pneg %p119
      $region42: #{tpu_custom_call.1} parent=31 // pred_check_branch
        %964 = sbr.rel (%p962) target = $region44
      $region43: #{tpu_custom_call.1} parent=31 // pred_region
        _
      $region44: #{tpu_custom_call.1} parent=31 // pred_fallthru
        _
    $region32: #{tpu_custom_call.1} parent=5 // pred_fallthru
      _
    %p965 = scmp.le.s32.totalorder 2, %s9
    // Predicated region
    $region45: #{tpu_custom_call.1} parent=5 // pred_check
      %p966 = pneg %p965
    $region46: #{tpu_custom_call.1} parent=5 // pred_check_branch
      %968 = sbr.rel (%p966) target = $region48
    $region47: #{tpu_custom_call.1} parent=5 // pred_region
      %s969 = ssub.s32 %s9, 2
      // Predicated region
      $region49: #{tpu_custom_call.1} parent=47 // pred_check
        %p970 = pneg %p125
      $region50: #{tpu_custom_call.1} parent=47 // pred_check_branch
        %972 = sbr.rel (%p970) target = $region52
      $region51: #{tpu_custom_call.1} parent=47 // pred_region
        %p973 = scmp.lt.s32.totalorder %s20, 1
        %s974 = scalar_select %p973, %s20, 1
        %s975 = scalar_lea.vmem %s3, %s974
      $region52: #{tpu_custom_call.1} parent=47 // pred_fallthru
        _
    $region48: #{tpu_custom_call.1} parent=5 // pred_fallthru
      _
  $region6: #{tpu_custom_call.1} parent=0 // loop_footer
    %s13 = sadd.s32 1, %s9
  $region7: #{tpu_custom_call.1} parent=0 // loop_footer_branch
    %8 = sbr.rel target = $region3
  $region8: #{tpu_custom_call.1} parent=0 // loop_exit
    _

</llo_original>
